<compile_context>
chip_gen: v7x
topology: tpu7x:2x2x1
jax: 0.10.0
libtpu: 0.0.40
codegen_flags: <defaults>
</compile_context>

<pallas_src>
import functools

import jax
import jax.numpy as jnp
from jax.experimental import pallas as pl
from jax.experimental.pallas import tpu as pltpu


_VMEM_LIMIT = 32 * 1024 * 1024     # safe scoped-VMEM budget on v5e / v6e / v7x
_FUSED_BUDGET = 12 * 1024 * 1024   # total live bytes allowed for the fused path
_BLOCK_BYTES = 2 * 1024 * 1024     # ~2 MiB activation block for the two-pass path


def _cdiv(a, b):
    return -(-a // b)


def _round_up(a, m):
    return _cdiv(a, m) * m


# --------------------------- shared finalize math ----------------------------

def _scale_shift(sum_c, sq_c, w_c, b_c, numel, eps):
    # Matches PyTorch: bias_var = (sumsq - sum*mean)/numel ; inv_std = rsqrt(bias_var+eps)
    inv_n = 1.0 / numel
    mean = sum_c * inv_n
    var = sq_c * inv_n - mean * mean
    inv_std = jax.lax.rsqrt(var + eps)
    scale = inv_std * w_c
    shift = b_c - mean * scale
    return scale, shift


# ------------------------------- kernels ------------------------------------

def _bn_fused_kernel(x_ref, w_ref, b_ref, o_ref, stat_ref, *, numel, eps):
    # x_ref/o_ref: (B, Ct, L) resident slab; w_ref/b_ref: (Ct, 1); stat_ref: (Ct, 2)
    x = x_ref[...].astype(jnp.float32)
    s_ = jnp.sum(jnp.sum(x, axis=0), axis=1, keepdims=True)        # (Ct, 1)
    sq = jnp.sum(jnp.sum(x * x, axis=0), axis=1, keepdims=True)    # (Ct, 1)
    scale, shift = _scale_shift(s_, sq, w_ref[...], b_ref[...], numel, eps)
    o_ref[...] = (x * scale[None] + shift[None]).astype(o_ref.dtype)
    stat_ref[:, 0:1] = s_
    stat_ref[:, 1:2] = sq


def _bn_reduce_kernel(x_ref, sum_ref, sq_ref, *, B, L, Bt, Lt, ns_per):
    # x_ref: (Bt, Ct, Lt); sum_ref/sq_ref: (1, Ct, 1) resident accumulators.
    p = pl.program_id(0)   # partial-sum split (parallel)
    b = pl.program_id(2)   # batch tiles (arbitrary, reduction)
    s = pl.program_id(3)   # spatial tiles within this split (arbitrary, reduction)

    @pl.when((b == 0) & (s == 0))
    def _():
        sum_ref[...] = jnp.zeros_like(sum_ref)
        sq_ref[...] = jnp.zeros_like(sq_ref)

    x = x_ref[...].astype(jnp.float32)
    # Mask ragged spatial / batch tiles (and fully-out-of-range split steps,
    # whose unclamped lane offsets are >= L).
    lane = (p * ns_per + s) * Lt + jax.lax.broadcasted_iota(jnp.int32, (Bt, 1, Lt), 2)
    row = b * Bt + jax.lax.broadcasted_iota(jnp.int32, (Bt, 1, Lt), 0)
    x = jnp.where((lane < L) & (row < B), x, 0.0)

    sum_ref[...] += jnp.sum(jnp.sum(x, axis=0), axis=1, keepdims=True)[None]
    sq_ref[...] += jnp.sum(jnp.sum(x * x, axis=0), axis=1, keepdims=True)[None]


def _bn_apply_kernel(x_ref, sum_ref, sq_ref, w_ref, b_ref, o_ref, *, numel, eps):
    # Finalize folded in-kernel (tiny (Ct,1) math, hidden under the tile DMA).
    scale, shift = _scale_shift(sum_ref[...], sq_ref[...], w_ref[...], b_ref[...],
                                numel, eps)
    x = x_ref[...].astype(jnp.float32)                              # (Bt, Ct, Lt)
    o_ref[...] = (x * scale[None] + shift[None]).astype(o_ref.dtype)


# ------------------------------- planning ------------------------------------

def _plan_fused(B, C, L, in_bytes, out_bytes):
    """Channel tile for the fused single-sweep path, or None if it won't fit."""
    per_elem = 2 * in_bytes + 2 * out_bytes + 8   # dbl-buffered in/out + f32 temps
    denom = per_elem * B * L
    if denom <= 0:
        return None
    max_ct = _FUSED_BUDGET // denom
    if max_ct >= C:
        if C >= 16:      # keep >=2 channel tiles so v7x's second core has work
            ct = min(C, max(8, _round_up(_cdiv(C, 2), 8)))
        else:
            ct = C
    else:
        ct = (max_ct // 8) * 8
        if ct < 8:
            return None
    return ct, _cdiv(C, ct)


def _plan_two_pass(B, C, L, in_bytes, block_bytes=None):
    target = max(1, (block_bytes or _BLOCK_BYTES) // in_bytes)   # elems per block
    ct = C if C <= 256 else 256                                  # full-C or mult-of-8
    nc = _cdiv(C, ct)
    if ct * L <= target:
        lt = L
        bt = max(1, min(B, target // (ct * L)))
    else:
        lt = max(128, (target // ct) // 128 * 128)               # multiple of 128
        bt = 1
    nb = _cdiv(B, bt)
    ns = _cdiv(L, lt)
    n_split = 2 if (nc == 1 and ns >= 2) else 1                  # v7x partial sums
    ns_per = _cdiv(ns, n_split)
    return ct, nc, lt, ns, bt, nb, n_split, ns_per


def _pad_col(v, rows):
    v = v.astype(jnp.float32).reshape(-1, 1)
    if v.shape[0] < rows:
        v = jnp.pad(v, ((0, rows - v.shape[0]), (0, 0)))
    return v


# ------------------------------- wrapper -------------------------------------

def batchnorm2d_forward(x, weight, bias, running_mean, running_var, *,
                        eps=1e-5, momentum=0.1,
                        force_two_pass=False, block_bytes=None):
    """Pallas re-implementation of BatchNorm2dReimpl.forward (training mode).

    Returns (output, new_running_mean, new_running_var); the running buffers
    are returned because JAX has no in-place module state.
    """
    B, C, H, W = x.shape
    L = H * W
    numel = B * L                      # NOTE: numel == 1 gives inf, same as PyTorch
    xf = x.reshape(B, C, L)            # free reshape, still NCHW order
    in_bytes = x.dtype.itemsize

    fused = None if force_two_pass else _plan_fused(B, C, L, in_bytes, in_bytes)

    if fused is not None:
        # -------- single sweep: read x once, write y once (2x HBM traffic) ----
        ct, nc = fused
        c_out = nc * ct
        w_p = _pad_col(weight, c_out)
        b_p = _pad_col(bias, c_out)
        kern = functools.partial(_bn_fused_kernel, numel=float(numel), eps=float(eps))
        y, stats = pl.pallas_call(
            kern,
            out_shape=(jax.ShapeDtypeStruct((B, C, L), x.dtype),
                       jax.ShapeDtypeStruct((c_out, 2), jnp.float32)),
            grid_spec=pltpu.PrefetchScalarGridSpec(
                num_scalar_prefetch=0,
                grid=(nc,),
                in_specs=[pl.BlockSpec((B, ct, L), lambda c: (0, c, 0)),
                          pl.BlockSpec((ct, 1), lambda c: (c, 0)),
                          pl.BlockSpec((ct, 1), lambda c: (c, 0))],
                out_specs=[pl.BlockSpec((B, ct, L), lambda c: (0, c, 0)),
                           pl.BlockSpec((ct, 2), lambda c: (c, 0))],
            ),
            compiler_params=pltpu.CompilerParams(
                dimension_semantics=("parallel",),
                vmem_limit_bytes=_VMEM_LIMIT),
        )(xf, w_p, b_p)
        sum_c = stats[:C, 0]
        sq_c = stats[:C, 1]
    else:
        # -------- pass 1: per-channel sum / sum-of-squares (fp32) -------------
        ct, nc, lt, ns, bt, nb, n_split, ns_per = _plan_two_pass(
            B, C, L, in_bytes, block_bytes)
        c_out = nc * ct

        reduce_kern = functools.partial(
            _bn_reduce_kernel, B=B, L=L, Bt=bt, Lt=lt, ns_per=ns_per)
        sums, sqs = pl.pallas_call(
            reduce_kern,
            out_shape=(jax.ShapeDtypeStruct((n_split, c_out, 1), jnp.float32),
                       jax.ShapeDtypeStruct((n_split, c_out, 1), jnp.float32)),
            grid_spec=pltpu.PrefetchScalarGridSpec(
                num_scalar_prefetch=0,
                grid=(n_split, nc, nb, ns_per),      # reduction axes (b, s) last
                in_specs=[pl.BlockSpec(
                    (bt, ct, lt),
                    lambda p, c, b, s: (b, c, jnp.minimum(p * ns_per + s, ns - 1)))],
                out_specs=[pl.BlockSpec((1, ct, 1), lambda p, c, b, s: (p, c, 0)),
                           pl.BlockSpec((1, ct, 1), lambda p, c, b, s: (p, c, 0))],
            ),
            compiler_params=pltpu.CompilerParams(
                dimension_semantics=("parallel", "parallel", "arbitrary", "arbitrary"),
                vmem_limit_bytes=_VMEM_LIMIT),
        )(xf)

        tot_sum = jnp.sum(sums, axis=0)              # add partials: (c_out, 1)
        tot_sq = jnp.sum(sqs, axis=0)

        # -------- pass 2: y = x * scale[c] + shift[c], fully parallel ----------
        w_p = _pad_col(weight, c_out)
        b_p = _pad_col(bias, c_out)
        apply_kern = functools.partial(_bn_apply_kernel,
                                       numel=float(numel), eps=float(eps))
        y = pl.pallas_call(
            apply_kern,
            out_shape=jax.ShapeDtypeStruct((B, C, L), x.dtype),
            grid_spec=pltpu.PrefetchScalarGridSpec(
                num_scalar_prefetch=0,
                grid=(nc, nb, ns),                   # channel outermost: stats fetched once/tile
                in_specs=[pl.BlockSpec((bt, ct, lt), lambda c, b, s: (b, c, s)),
                          pl.BlockSpec((ct, 1), lambda c, b, s: (c, 0)),
                          pl.BlockSpec((ct, 1), lambda c, b, s: (c, 0)),
                          pl.BlockSpec((ct, 1), lambda c, b, s: (c, 0)),
                          pl.BlockSpec((ct, 1), lambda c, b, s: (c, 0))],
                out_specs=pl.BlockSpec((bt, ct, lt), lambda c, b, s: (b, c, s)),
            ),
            compiler_params=pltpu.CompilerParams(
                dimension_semantics=("parallel", "parallel", "parallel"),
                vmem_limit_bytes=_VMEM_LIMIT),
        )(xf, tot_sum, tot_sq, w_p, b_p)
        sum_c = tot_sum[:C, 0]
        sq_c = tot_sq[:C, 0]

    # ---- tiny O(C) running-stat update in plain JAX (not on pass-2 critical path) ----
    mean = sum_c / numel
    sumvar = sq_c - sum_c * mean            # matches PyTorch (incl. its cancellation risk)
    unbias_var = sumvar / (numel - 1)
    new_rm = (1.0 - momentum) * running_mean.astype(jnp.float32) + momentum * mean
    new_rv = (1.0 - momentum) * running_var.astype(jnp.float32) + momentum * unbias_var

    return (y.reshape(B, C, H, W),
            new_rm.astype(running_mean.dtype),
            new_rv.astype(running_var.dtype))


# --------------------------------- main --------------------------------------

if __name__ == "__main__":
    key = jax.random.PRNGKey(0)
    EPS, MOM = 1e-5, 0.1

    def torch_reference(x, weight, bias, rm, rv):
        B, C, H, W = x.shape
        numel = B * H * W
        xr = jnp.transpose(x, (1, 0, 2, 3)).reshape(C, numel)
        sum_ = xr.sum(1)
        sumsq = (xr ** 2).sum(1)
        mean = sum_ / numel
        sumvar = sumsq - sum_ * mean
        bias_var = sumvar / numel
        inv_std = 1.0 / jnp.sqrt(bias_var + EPS)
        out = ((xr - mean[:, None]) * inv_std[:, None]
               * weight[:, None] + bias[:, None])
        out = jnp.transpose(out.reshape(C, B, H, W), (1, 0, 2, 3))
        new_rm = (1 - MOM) * rm + MOM * mean
        new_rv = (1 - MOM) * rv + MOM * (sumvar / (numel - 1))
        return out, new_rm, new_rv

    def check(shape, *, force_two_pass=False, block_bytes=None, seed=0):
        kx, kw = jax.random.split(jax.random.fold_in(key, seed))
        B, C, H, W = shape
        x = jax.random.normal(kx, shape, jnp.float32) * 2.0 + 0.5
        # reset_parameters(): weight ~ U(0,1), bias = 0; running stats 0 / 1.
        weight = jax.random.uniform(kw, (C,), jnp.float32)
        bias = jnp.zeros((C,), jnp.float32)
        rm = jnp.zeros((C,), jnp.float32)
        rv = jnp.ones((C,), jnp.float32)

        y, nrm, nrv = batchnorm2d_forward(
            x, weight, bias, rm, rv, eps=EPS, momentum=MOM,
            force_two_pass=force_two_pass, block_bytes=block_bytes)
        y, nrm, nrv = jax.block_until_ready((y, nrm, nrv))

        yr, rmr, rvr = torch_reference(x, weight, bias, rm, rv)
        assert y.shape == shape
        assert nrm.shape == (C,) and nrv.shape == (C,)
        assert jnp.allclose(y, yr, atol=2e-4, rtol=2e-4), \
            (shape, float(jnp.max(jnp.abs(y - yr))))
        assert jnp.allclose(nrm, rmr, atol=1e-4, rtol=1e-4)
        assert jnp.allclose(nrv, rvr, atol=1e-3, rtol=1e-3)

    # Primary module-sized shape -> fused single-sweep path.
    check((2, 4, 16, 16), seed=0)
    # Two-pass path on the same shape.
    check((2, 4, 16, 16), force_two_pass=True, seed=1)
    # Two-pass, tiny blocks: exercises ragged spatial tiles + split partial sums.
    check((3, 5, 20, 20), force_two_pass=True, block_bytes=4096, seed=2)
    # Two-pass, ragged batch tiles (Bt=2 over B=3).
    check((3, 4, 16, 16), force_two_pass=True, block_bytes=8192, seed=3)

    print("KERNEL_OK")
</pallas_src>

<mosaic_0001>
module attributes {stable_mosaic.version = 11 : i64} {
  func.func @_bn_fused_kernel(%arg0: i32, %arg1: memref<2x4x256xf32, #tpu.memory_space<vmem>>, %arg2: memref<4x1xf32, #tpu.memory_space<vmem>>, %arg3: memref<4x1xf32, #tpu.memory_space<vmem>>, %arg4: memref<2x4x256xf32, #tpu.memory_space<vmem>>, %arg5: memref<4x2xf32, #tpu.memory_space<vmem>>) attributes {dimension_semantics = [#tpu.dimension_semantics<parallel>], iteration_bounds = array<i64: 1>, scalar_prefetch = 0 : i64, scratch_operands = 0 : i64, tpu.core_type = #tpu.core_type<tc>, window_params = [{transform_indices = @transform_0, window_bounds = array<i64: 2, 4, 256>}, {transform_indices = @transform_1, window_bounds = array<i64: 4, 1>}, {transform_indices = @transform_2, window_bounds = array<i64: 4, 1>}, {transform_indices = @transform_3, window_bounds = array<i64: 2, 4, 256>}, {transform_indices = @transform_4, window_bounds = array<i64: 4, 2>}]} {
    %c0 = arith.constant 0 : index
    %c0_0 = arith.constant 0 : index
    %c0_1 = arith.constant 0 : index
    %0 = vector.load %arg1[%c0, %c0_0, %c0_1] : memref<2x4x256xf32, #tpu.memory_space<vmem>>, vector<2x4x256xf32>
    %cst = arith.constant dense<0.000000e+00> : vector<4x256xf32>
    %1 = vector.multi_reduction <add>, %0, %cst [0] : vector<2x4x256xf32> to vector<4x256xf32>
    %cst_2 = arith.constant dense<0.000000e+00> : vector<4xf32>
    %2 = vector.multi_reduction <add>, %1, %cst_2 [1] : vector<4x256xf32> to vector<4xf32>
    %3 = vector.shape_cast %2 : vector<4xf32> to vector<4x1xf32>
    %4 = arith.mulf %0, %0 : vector<2x4x256xf32>
    %cst_3 = arith.constant dense<0.000000e+00> : vector<4x256xf32>
    %5 = vector.multi_reduction <add>, %4, %cst_3 [0] : vector<2x4x256xf32> to vector<4x256xf32>
    %cst_4 = arith.constant dense<0.000000e+00> : vector<4xf32>
    %6 = vector.multi_reduction <add>, %5, %cst_4 [1] : vector<4x256xf32> to vector<4xf32>
    %7 = vector.shape_cast %6 : vector<4xf32> to vector<4x1xf32>
    %c0_5 = arith.constant 0 : index
    %c0_6 = arith.constant 0 : index
    %8 = vector.load %arg2[%c0_5, %c0_6] : memref<4x1xf32, #tpu.memory_space<vmem>>, vector<4x1xf32>
    %c0_7 = arith.constant 0 : index
    %c0_8 = arith.constant 0 : index
    %9 = vector.load %arg3[%c0_7, %c0_8] : memref<4x1xf32, #tpu.memory_space<vmem>>, vector<4x1xf32>
    %cst_9 = arith.constant 0.001953125 : f32
    %10 = vector.broadcast %cst_9 : f32 to vector<4x1xf32>
    %11 = arith.mulf %3, %10 : vector<4x1xf32>
    %cst_10 = arith.constant 0.001953125 : f32
    %12 = vector.broadcast %cst_10 : f32 to vector<4x1xf32>
    %13 = arith.mulf %7, %12 : vector<4x1xf32>
    %14 = arith.mulf %11, %11 : vector<4x1xf32>
    %15 = arith.subf %13, %14 : vector<4x1xf32>
    %cst_11 = arith.constant 9.99999974E-6 : f32
    %16 = vector.broadcast %cst_11 : f32 to vector<4x1xf32>
    %17 = arith.addf %15, %16 : vector<4x1xf32>
    %18 = math.rsqrt %17 : vector<4x1xf32>
    %19 = arith.mulf %18, %8 : vector<4x1xf32>
    %20 = arith.mulf %11, %19 : vector<4x1xf32>
    %21 = arith.subf %9, %20 : vector<4x1xf32>
    %22 = vector.shape_cast %19 : vector<4x1xf32> to vector<1x4x1xf32>
    %23 = vector.broadcast %22 : vector<1x4x1xf32> to vector<2x4x256xf32>
    %24 = arith.mulf %0, %23 : vector<2x4x256xf32>
    %25 = vector.shape_cast %21 : vector<4x1xf32> to vector<1x4x1xf32>
    %26 = vector.broadcast %25 : vector<1x4x1xf32> to vector<2x4x256xf32>
    %27 = arith.addf %24, %26 : vector<2x4x256xf32>
    %c0_12 = arith.constant 0 : index
    %c0_13 = arith.constant 0 : index
    %c0_14 = arith.constant 0 : index
    %28 = vector.load %arg4[%c0_12, %c0_13, %c0_14] : memref<2x4x256xf32, #tpu.memory_space<vmem>>, vector<2x4x256xf32>
    tpu.vector_store %arg4[%c0_12, %c0_13, %c0_14], %27 {strides = array<i32>} : memref<2x4x256xf32, #tpu.memory_space<vmem>>, vector<2x4x256xf32>,
    %c0_15 = arith.constant 0 : index
    %c0_16 = arith.constant 0 : index
    %29 = vector.load %arg5[%c0_15, %c0_16] : memref<4x2xf32, #tpu.memory_space<vmem>>, vector<4x1xf32>
    tpu.vector_store %arg5[%c0_15, %c0_16], %3 {strides = array<i32>} : memref<4x2xf32, #tpu.memory_space<vmem>>, vector<4x1xf32>,
    %c0_17 = arith.constant 0 : index
    %c1 = arith.constant 1 : index
    %30 = vector.load %arg5[%c0_17, %c1] : memref<4x2xf32, #tpu.memory_space<vmem>>, vector<4x1xf32>
    tpu.vector_store %arg5[%c0_17, %c1], %7 {strides = array<i32>} : memref<4x2xf32, #tpu.memory_space<vmem>>, vector<4x1xf32>,
    return
  }
  func.func @transform_0(%arg0: i32) -> (i32, i32, i32) {
    %c0_i32 = arith.constant 0 : i32
    %c0_i32_0 = arith.constant 0 : i32
    %c0_i32_1 = arith.constant 0 : i32
    return %c0_i32, %arg0, %c0_i32_0 : i32, i32, i32
  }
  func.func @transform_1(%arg0: i32) -> (i32, i32) {
    %c0_i32 = arith.constant 0 : i32
    %c0_i32_0 = arith.constant 0 : i32
    return %arg0, %c0_i32 : i32, i32
  }
  func.func @transform_2(%arg0: i32) -> (i32, i32) {
    %c0_i32 = arith.constant 0 : i32
    %c0_i32_0 = arith.constant 0 : i32
    return %arg0, %c0_i32 : i32, i32
  }
  func.func @transform_3(%arg0: i32) -> (i32, i32, i32) {
    %c0_i32 = arith.constant 0 : i32
    %c0_i32_0 = arith.constant 0 : i32
    %c0_i32_1 = arith.constant 0 : i32
    return %c0_i32, %arg0, %c0_i32_0 : i32, i32, i32
  }
  func.func @transform_4(%arg0: i32) -> (i32, i32) {
    %c0_i32 = arith.constant 0 : i32
    %c0_i32_0 = arith.constant 0 : i32
    return %arg0, %c0_i32 : i32, i32
  }
}

</mosaic_0001>

<llo_original>
// kernel: tpu_custom_call.1
$region0: #{tpu_custom_call.1}
  #allocation0 [shape = 'u32[]', space=smem, size = 0x4, offset = 0x4, fixed_abs, tag = 'smem constant byte address 0x4 - core index']
  #allocation1 [shape = 'u32[144,128]{1,0:T(1,128)}', space=vmem, size = 0x12000, scoped, tag = 'internal scratch']
  %s0 = inlined_call_operand.hbm [shape: f32[2,4,256], index: 0, kind: input, shape index: {}]
  %s1 = inlined_call_operand.vmem [shape: f32[4,1], index: 1, kind: input, shape index: {}]
  %s2 = inlined_call_operand.vmem [shape: f32[4,1], index: 2, kind: input, shape index: {}]
  %s3 = inlined_call_operand.hbm [shape: f32[2,4,256], index: 3, kind: output, shape index: {0}]
  %s4 = inlined_call_operand.vmem [shape: f32[4,2], index: 4, kind: output, shape index: {1}]
  %5 = xla_tuple %s3, %s4
  %s6 = sld [smem:[#allocation0]]
  $region34: #{tpu_custom_call.1} parent=0
    _
  %s8 = ssub.s32 1, %s6
  %s9 = scalar_select 0, %s8, %s6
  $region1: #{tpu_custom_call.1} parent=0
    #allocation2 [shape = 'u8[8192]{0}', space=vmem, size = 0x2000, scoped, tag = 'input window, operand 0, single buffered']
    #allocation3 [shape = 's32[1]{0}', space=sflag, size = 0x4, scoped, tag = 'scoped memory for tpu_custom_call.1']
    #allocation4 [shape = 's32[1]{0}', space=sflag, size = 0x4, scoped, tag = 'scoped memory for tpu_custom_call.1']
    #allocation5 [shape = 'u8[8192]{0}', space=vmem, size = 0x2000, scoped, tag = 'output window, operand 0, single buffered']
    %10 = vsyncpa [#allocation3], 0
    %11 = vsyncpa [#allocation4], 0
    // Predicated region
    $region2: #{tpu_custom_call.1} parent=1 // pred_check
      _
    $region3: #{tpu_custom_call.1} parent=1 // pred_check_branch
      %13 = sbr.rel (0) target = $region5
    $region4: #{tpu_custom_call.1} parent=1 // pred_region
      %s15 = ssub.s32 256, 256
      %16 = vsyncadd [#allocation3], %s15
      %s17 = sshll.u32 [#allocation2], 4
      %s18 = int_to_ptr.vmem [resolvable:$true] %s17
      %23 = dma.hbm_to_vmem [thread:$0]  %s0, 256, %s18, [#allocation3], 128, 128, 8
    $region5: #{tpu_custom_call.1} parent=1 // pred_fallthru
      _
    // Predicated region
    $region6: #{tpu_custom_call.1} parent=1 // pred_check
      _
    $region7: #{tpu_custom_call.1} parent=1 // pred_check_branch
      %25 = sbr.rel (0) target = $region9
    $region8: #{tpu_custom_call.1} parent=1 // pred_region
      _
    $region9: #{tpu_custom_call.1} parent=1 // pred_fallthru
      _
    // Predicated region
    $region10: #{tpu_custom_call.1} parent=1 // pred_check
      _
    $region11: #{tpu_custom_call.1} parent=1 // pred_check_branch
      %27 = sbr.rel (0) target = $region13
    $region12: #{tpu_custom_call.1} parent=1 // pred_region
      _
    $region13: #{tpu_custom_call.1} parent=1 // pred_fallthru
      _
    // Predicated region
    $region14: #{tpu_custom_call.1} parent=1 // pred_check
      _
    $region15: #{tpu_custom_call.1} parent=1 // pred_check_branch
      %29 = sbr.rel (0) target = $region17
    $region16: #{tpu_custom_call.1} parent=1 // pred_region
      %30 = dma.done [#allocation3], 256
    $region17: #{tpu_custom_call.1} parent=1 // pred_fallthru
      _
    %v31 = vld [vmem:[#allocation2] sm:$0xff]
    %v32 = vld [vmem:[#allocation2 + $0x8] sm:$0xff]
    %v35 = vcombine.high %v31, %v31
    %v36 = vcombine.high %v32, %v32
    %vm39 = vcmask 1043456
    %v40 = vsel %vm39, %v31, 0.0
    %v41 = vsel %vm39, %v32, 0.0
    %v42 = vadd.f32 %v40, %v41
    %v43 = vsel %vm39, %v35, 0.0
    %v44 = vsel %vm39, %v36, 0.0
    %v45 = vadd.f32 %v43, %v44
    %v46 = vsel %vm39, %v42, 0.0
    %v47 = vsel %vm39, %v45, 0.0
    %v48 = vadd.f32 %v46, %v47
    %49 = vadd.xlane.f32.xlu0 %v48
    %v50 = vpop.xlane.xlu0 %49
    %v51 = vmul.f32 %v31, %v31
    %v52 = vmul.f32 %v32, %v32
    %v55 = vcombine.high %v51, %v51
    %v56 = vcombine.high %v52, %v52
    %v59 = vsel %vm39, %v51, 0.0
    %v60 = vsel %vm39, %v52, 0.0
    %v61 = vadd.f32 %v59, %v60
    %v62 = vsel %vm39, %v55, 0.0
    %v63 = vsel %vm39, %v56, 0.0
    %v64 = vadd.f32 %v62, %v63
    %v65 = vsel %vm39, %v61, 0.0
    %v66 = vsel %vm39, %v64, 0.0
    %v67 = vadd.f32 %v65, %v66
    %68 = vadd.xlane.f32.xlu0 %v67
    %v69 = vpop.xlane.xlu0 %68
    %v70 = vld [vmem:[%s1] sm:$0xf]
    %v71 = vld [vmem:[%s2] sm:$0xf]
    %v72 = vmul.f32 %v50, 0.001953125
    %v73 = vmul.f32 %v69, 0.001953125
    %v74 = vmul.f32 %v72, %v72
    %v75 = vsub.f32 %v73, %v74
    %v76 = vadd.f32 %v75, 1e-05
    %v77 = vrsqrt.pop %v76
    %v78 = vmul.f32 %v77, %v70
    %v79 = vmul.f32 %v72, %v78
    %v80 = vsub.f32 %v71, %v79
    %82 = vset.pattern.permute.xlu0 0
    %83 = vperm.xlu0 %82, %v78
    %v84 = vpop.permute.xlu0 %83
    %v86 = vunpack.c.l.s4 839922192
    %v87 = vunpack.c.0.s8 %v86
    %v88 = vlaneseq
    %v89 = vshrl.u32 %v88, 7
    %v90 = vsub.s32 %v87, %v89
    %v91 = vrot.slane %v84, %v90
    %v93 = vmul.f32 %v31, %v91
    %v94 = vmul.f32 %v32, %v91
    %96 = vset.pattern.permute.xlu0 0
    %97 = vperm.xlu0 %96, %v80
    %v98 = vpop.permute.xlu0 %97
    %v100 = vunpack.c.l.s4 839922192
    %v101 = vunpack.c.0.s8 %v100
    %v102 = vlaneseq
    %v103 = vshrl.u32 %v102, 7
    %v104 = vsub.s32 %v101, %v103
    %v105 = vrot.slane %v98, %v104
    %v107 = vadd.f32 %v93, %v105
    %v108 = vadd.f32 %v94, %v105
    %109 = vst [vmem:[#allocation5] sm:$0xff] %v107
    %110 = vst [vmem:[#allocation5 + $0x8] sm:$0xff] %v108
    %vm111 = vcmask 3072
    %112 = vst.msk [vmem:[%s4] sm:$0xf] %vm111, %v50
    %vm113 = vcmask 11272
    %114 = vst.msk [vmem:[%s4] sm:$0xf] %vm113, %v69
    // Predicated region
    $region18: #{tpu_custom_call.1} parent=1 // pred_check
      _
    $region19: #{tpu_custom_call.1} parent=1 // pred_check_branch
      %116 = sbr.rel (0) target = $region21
    $region20: #{tpu_custom_call.1} parent=1 // pred_region
      %s118 = ssub.s32 256, 256
      %119 = vsyncadd [#allocation4], %s118
      %s120 = sshll.u32 [#allocation5], 4
      %s121 = int_to_ptr.vmem [resolvable:$true] %s120
      %126 = dma.vmem_to_hbm [thread:$0]  %s121, 256, %s3, [#allocation4], 128, 128, 8
    $region21: #{tpu_custom_call.1} parent=1 // pred_fallthru
      _
    // Predicated region
    $region22: #{tpu_custom_call.1} parent=1 // pred_check
      _
    $region23: #{tpu_custom_call.1} parent=1 // pred_check_branch
      %128 = sbr.rel (0) target = $region25
    $region24: #{tpu_custom_call.1} parent=1 // pred_region
      _
    $region25: #{tpu_custom_call.1} parent=1 // pred_fallthru
      _
    // Predicated region
    $region26: #{tpu_custom_call.1} parent=1 // pred_check
      _
    $region27: #{tpu_custom_call.1} parent=1 // pred_check_branch
      %130 = sbr.rel (0) target = $region29
    $region28: #{tpu_custom_call.1} parent=1 // pred_region
      %131 = dma.done [#allocation4], 256
    $region29: #{tpu_custom_call.1} parent=1 // pred_fallthru
      _
    // Predicated region
    $region30: #{tpu_custom_call.1} parent=1 // pred_check
      _
    $region31: #{tpu_custom_call.1} parent=1 // pred_check_branch
      %133 = sbr.rel (0) target = $region33
    $region32: #{tpu_custom_call.1} parent=1 // pred_region
      _
    $region33: #{tpu_custom_call.1} parent=1 // pred_fallthru
      _
    %134 = vsyncpa [#allocation3], 1
    %135 = vsyncpa [#allocation4], 1

</llo_original>
